<compile_context>
chip_gen: v7x
topology: tpu7x:2x2x1
jax: 0.10.0
libtpu: 0.0.40
codegen_flags: <defaults>
</compile_context>

<pallas_src>
import functools
import math

import jax
import jax.numpy as jnp
from jax.experimental import pallas as pl
from jax.experimental.pallas import tpu as pltpu


def _ntxent_kernel(rows_ref, cols_ref, out_ref, l_ref, *, inv_t, tm):
    i = pl.program_id(0)            # row block    (parallel / megacore)
    j = pl.program_id(1)            # column block (online reduction, arbitrary)
    f32 = jnp.float32

    @pl.when(j == 0)
    def _init():
        l_ref[...] = jnp.zeros_like(l_ref)

    rows = rows_ref[...]            # (2*tm, d) bf16, pre-normalized, 1/sqrt(T) folded
    cols = cols_ref[...]            # (2*tm, d) bf16
    # Single fused MXU matmul: contract the feature dim of both operands
    # (A @ B^T without an explicit transpose), bf16 operands, f32 accumulate.
    dn = (((1,), (1,)), ((), ()))
    s = jax.lax.dot_general(rows, cols, dn, preferred_element_type=f32)
    # Constant LSE shift: cosine logits are bounded above by 1/T.
    e = jnp.exp(s - f32(inv_t))

    @pl.when(i == j)
    def _acc_diag_tile():
        m, n = e.shape
        r = jax.lax.broadcasted_iota(jnp.int32, (m, 1), 0)
        c = jax.lax.broadcasted_iota(jnp.int32, (1, n), 1)
        # Self-similarity sits exactly on the main tile diagonal (rows and cols
        # share the [zjs block ; zis block] packing); the positive partner is at
        # (k, tm+k) / (tm+k, k) and stays unmasked, matching the reference.
        l_ref[...] += jnp.sum(jnp.where(r != c, e, 0.0), axis=-1, keepdims=True)

    @pl.when(i != j)
    def _acc_off_tile():
        l_ref[...] += jnp.sum(e, axis=-1, keepdims=True)

    @pl.when(j == pl.num_programs(1) - 1)
    def _finalize():
        # Positive logit cos(zjs_a, zis_a) / T; same value for both rows of a pair.
        pos = jnp.sum(rows[:tm, :].astype(f32) * rows[tm:, :].astype(f32),
                      axis=-1, keepdims=True)
        lse = f32(inv_t) + jnp.log(l_ref[...])
        out_ref[...] = lse - jnp.concatenate([pos, pos], axis=0)


def _vmem_capacity_bytes():
    try:
        info = pltpu.get_tpu_info()
        cap = getattr(info, "vmem_capacity_bytes", None)
        if cap:
            return int(cap)
    except Exception:
        pass
    return 64 * 1024 * 1024   # conservative: v7x per-TensorCore VMEM


def _vmem_estimate(t, d):
    # rows + cols blocks, double-buffered, bf16:
    inputs = 2 * 2 * (2 * t) * d * 2
    # matmul result / exp / diagonal-mask temporaries, f32 (2t, 2t) (generous):
    temps = 6 * (2 * t) * (2 * t) * 4
    return inputs + temps + (2 << 20)


def _pick_tile(b, d, vmem_cap):
    # Largest tile that divides B and whose blocks fit the per-core VMEM budget
    # (headroom left for Mosaic internal scratch).  Prefer >= 2 row blocks so the
    # "parallel" row axis actually splits across TensorCores on megacore parts.
    budget = vmem_cap - 16 * 1024 * 1024
    fitting = [c for c in (512, 256, 128, 64, 32, 16, 8)
               if b % c == 0 and _vmem_estimate(c, d) <= budget]
    if not fitting:
        return b                      # tiny / odd batch: single full-height block
    for c in fitting:
        if b // c >= 2:
            return c
    return fitting[0]


def _prenormalize(x, sqrt_inv_t):
    # Cosine pre-normalization with 1/sqrt(T) folded in (f32 math, bf16 output
    # for the MXU and to halve streamed bytes).
    # NOTE: per-row eps clamp; differs from torch's clamp on the norm *product*
    # only for degenerate rows with norm < ~1e-4.
    x = x.astype(jnp.float32)
    sq = jnp.sum(x * x, axis=-1, keepdims=True)
    inv = jax.lax.rsqrt(jnp.maximum(sq, jnp.float32(1e-16))) * jnp.float32(sqrt_inv_t)
    return (x * inv).astype(jnp.bfloat16)


def ntxent_loss(zis, zjs, temperature=0.5):
    """NT-Xent loss (use_cosine_similarity=True, atten_same_patch=False)."""
    # TODO(synk): atten_same_patch=True re-weighting branch not implemented
    # (the reference forward defaults to False).
    assert zis.shape == zjs.shape and zis.ndim == 2
    b, d = zis.shape
    n = 2 * b
    inv_t = 1.0 / float(temperature)
    sqrt_inv_t = math.sqrt(inv_t)

    cap = _vmem_capacity_bytes()
    tm = _pick_tile(b, d, cap)
    nrb = b // tm

    # One normalization pass in the wrapper (O(B*d), fused by XLA), then pack
    # block-interleaved so kernel row/col block k = [zjs block k ; zis block k].
    zjs_hat = _prenormalize(zjs, sqrt_inv_t)
    zis_hat = _prenormalize(zis, sqrt_inv_t)
    reps = jnp.stack(
        [zjs_hat.reshape(nrb, tm, d), zis_hat.reshape(nrb, tm, d)], axis=1
    ).reshape(n, d)

    est = _vmem_estimate(tm, d)
    vmem_limit = int(min(cap - 8 * 1024 * 1024,
                         max(est + 16 * 1024 * 1024, 32 * 1024 * 1024)))

    kernel = functools.partial(_ntxent_kernel, inv_t=inv_t, tm=tm)
    grid_spec = pltpu.PrefetchScalarGridSpec(
        num_scalar_prefetch=0,
        grid=(nrb, nrb),
        in_specs=[
            pl.BlockSpec((2 * tm, d), lambda i, j: (i, 0)),   # row block of reps
            pl.BlockSpec((2 * tm, d), lambda i, j: (j, 0)),   # column block of reps
        ],
        out_specs=pl.BlockSpec((2 * tm, 1), lambda i, j: (i, 0)),
        scratch_shapes=[pltpu.VMEM((2 * tm, 1), jnp.float32)],  # running sum-exp
    )
    out = pl.pallas_call(
        kernel,
        out_shape=jax.ShapeDtypeStruct((n, 1), jnp.float32),
        grid_spec=grid_spec,
        compiler_params=pltpu.CompilerParams(
            dimension_semantics=("parallel", "arbitrary"),
            vmem_limit_bytes=vmem_limit,
        ),
    )(reps, reps)
    # Tiny final reduction (N floats) stays in the wrapper; the per-row order is
    # a permutation of the canonical one, which the sum does not care about.
    return jnp.sum(out) / jnp.float32(n)


def _reference_loss(zis, zjs, temperature):
    # Pure-JAX mirror of the PyTorch forward (f32 throughout).
    b = zis.shape[0]
    n = 2 * b
    reps = jnp.concatenate([zjs, zis], axis=0).astype(jnp.float32)
    norms = jnp.linalg.norm(reps, axis=-1, keepdims=True)
    dots = jnp.dot(reps, reps.T, precision=jax.lax.Precision.HIGHEST)
    sim = dots / jnp.maximum(norms * norms.T, 1e-8)
    logits = sim / temperature
    idx = jnp.arange(n)
    pos = logits[idx, (idx + b) % n]
    masked = jnp.where(jnp.eye(n, dtype=bool), -jnp.inf, logits)
    lse = jax.scipy.special.logsumexp(masked, axis=-1)
    return jnp.sum(lse - pos) / n


if __name__ == "__main__":
    key = jax.random.PRNGKey(0)
    temperature = 0.5

    # Single-tile case (B=8 -> one (16,16) grid-free step).
    k1, k2 = jax.random.split(key)
    B, D = 8, 32
    zis = jax.random.normal(k1, (B, D), dtype=jnp.float32)
    zjs = jax.random.normal(k2, (B, D), dtype=jnp.float32)
    loss = jax.block_until_ready(ntxent_loss(zis, zjs, temperature))
    ref = _reference_loss(zis, zjs, temperature)
    assert jnp.allclose(loss, ref, rtol=1e-2, atol=1e-2), (loss, ref)

    # Multi-tile case: 3x3 grid of (16,16) blocks, exercising the online column
    # reduction, diagonal-tile-only masking, and the block-interleaved packing.
    k3, k4 = jax.random.split(k1)
    B2, D2 = 24, 32
    zis2 = jax.random.normal(k3, (B2, D2), dtype=jnp.float32)
    zjs2 = jax.random.normal(k4, (B2, D2), dtype=jnp.float32)
    loss2 = jax.block_until_ready(ntxent_loss(zis2, zjs2, temperature))
    ref2 = _reference_loss(zis2, zjs2, temperature)
    assert jnp.allclose(loss2, ref2, rtol=1e-2, atol=1e-2), (loss2, ref2)

    print("KERNEL_OK")
</pallas_src>

<mosaic_0001>
module attributes {stable_mosaic.version = 11 : i64} {
  func.func @_ntxent_kernel(%arg0: i32, %arg1: i32, %arg2: memref<16x32xbf16, #tpu.memory_space<vmem>>, %arg3: memref<16x32xbf16, #tpu.memory_space<vmem>>, %arg4: memref<16x1xf32, #tpu.memory_space<vmem>>, %arg5: memref<16x1xf32, #tpu.memory_space<vmem>>) attributes {dimension_semantics = [#tpu.dimension_semantics<parallel>, #tpu.dimension_semantics<arbitrary>], iteration_bounds = array<i64: 1, 1>, scalar_prefetch = 0 : i64, scratch_operands = 1 : i64, tpu.core_type = #tpu.core_type<tc>, window_params = [{transform_indices = @transform_0, window_bounds = array<i64: 16, 32>}, {transform_indices = @transform_1, window_bounds = array<i64: 16, 32>}, {transform_indices = @transform_2, window_bounds = array<i64: 16, 1>}]} {
    %c0_i32 = arith.constant 0 : i32
    %0 = arith.cmpi eq, %arg1, %c0_i32 : i32
    %1 = arith.extui %0 : i1 to i32
    %c0_i32_0 = arith.constant 0 : i32
    %2 = arith.cmpi ne, %1, %c0_i32_0 : i32
    scf.if %2 {
      %cst_9 = arith.constant 0.000000e+00 : f32
      %18 = vector.broadcast %cst_9 : f32 to vector<16x1xf32>
      %c0_10 = arith.constant 0 : index
      %c0_11 = arith.constant 0 : index
      %19 = vector.load %arg5[%c0_10, %c0_11] : memref<16x1xf32, #tpu.memory_space<vmem>>, vector<16x1xf32>
      tpu.vector_store %arg5[%c0_10, %c0_11], %18 {strides = array<i32>} : memref<16x1xf32, #tpu.memory_space<vmem>>, vector<16x1xf32>,
    } else {
    }
    %c0 = arith.constant 0 : index
    %c0_1 = arith.constant 0 : index
    %3 = vector.load %arg2[%c0, %c0_1] : memref<16x32xbf16, #tpu.memory_space<vmem>>, vector<16x32xbf16>
    %c0_2 = arith.constant 0 : index
    %c0_3 = arith.constant 0 : index
    %4 = vector.load %arg3[%c0_2, %c0_3] : memref<16x32xbf16, #tpu.memory_space<vmem>>, vector<16x32xbf16>
    %cst = arith.constant dense<0.000000e+00> : vector<16x16xf32>
    %5 = tpu.matmul %3, %4, %cst {dimension_numbers = #tpu.dot_dimension_numbers<[1], [1], [0], [0], [0, 0, 1, 0], [], []>} : vector<16x32xbf16>, vector<16x32xbf16>, vector<16x16xf32> -> vector<16x16xf32>
    %cst_4 = arith.constant 2.000000e+00 : f32
    %6 = vector.broadcast %cst_4 : f32 to vector<16x16xf32>
    %7 = arith.subf %5, %6 : vector<16x16xf32>
    %8 = math.exp %7 : vector<16x16xf32>
    %9 = arith.cmpi eq, %arg0, %arg1 : i32
    %10 = arith.extui %9 : i1 to i32
    %c0_i32_5 = arith.constant 0 : i32
    %11 = arith.cmpi ne, %10, %c0_i32_5 : i32
    scf.if %11 {
      %18 = tpu.iota {dimensions = array<i32: 0>} : vector<16x1xi32>
      %19 = tpu.iota {dimensions = array<i32: 1>} : vector<1x16xi32>
      %c0_9 = arith.constant 0 : index
      %c0_10 = arith.constant 0 : index
      %20 = vector.load %arg5[%c0_9, %c0_10] : memref<16x1xf32, #tpu.memory_space<vmem>>, vector<16x1xf32>
      %21 = vector.broadcast %18 : vector<16x1xi32> to vector<16x16xi32>
      %22 = vector.broadcast %19 : vector<1x16xi32> to vector<16x16xi32>
      %23 = arith.cmpi ne, %21, %22 : vector<16x16xi32>
      %cst_11 = arith.constant 0.000000e+00 : f32
      %24 = vector.broadcast %cst_11 : f32 to vector<16x16xf32>
      %25 = arith.select %23, %8, %24 : vector<16x16xi1>, vector<16x16xf32>
      %cst_12 = arith.constant dense<0.000000e+00> : vector<16xf32>
      %26 = vector.multi_reduction <add>, %25, %cst_12 [1] : vector<16x16xf32> to vector<16xf32>
      %27 = vector.shape_cast %26 : vector<16xf32> to vector<16x1xf32>
      %28 = arith.addf %20, %27 : vector<16x1xf32>
      %c0_13 = arith.constant 0 : index
      %c0_14 = arith.constant 0 : index
      %29 = vector.load %arg5[%c0_13, %c0_14] : memref<16x1xf32, #tpu.memory_space<vmem>>, vector<16x1xf32>
      tpu.vector_store %arg5[%c0_13, %c0_14], %28 {strides = array<i32>} : memref<16x1xf32, #tpu.memory_space<vmem>>, vector<16x1xf32>,
    } else {
    }
    %12 = arith.cmpi ne, %arg0, %arg1 : i32
    %13 = arith.extui %12 : i1 to i32
    %c0_i32_6 = arith.constant 0 : i32
    %14 = arith.cmpi ne, %13, %c0_i32_6 : i32
    scf.if %14 {
      %c0_9 = arith.constant 0 : index
      %c0_10 = arith.constant 0 : index
      %18 = vector.load %arg5[%c0_9, %c0_10] : memref<16x1xf32, #tpu.memory_space<vmem>>, vector<16x1xf32>
      %cst_11 = arith.constant dense<0.000000e+00> : vector<16xf32>
      %19 = vector.multi_reduction <add>, %8, %cst_11 [1] : vector<16x16xf32> to vector<16xf32>
      %20 = vector.shape_cast %19 : vector<16xf32> to vector<16x1xf32>
      %21 = arith.addf %18, %20 : vector<16x1xf32>
      %c0_12 = arith.constant 0 : index
      %c0_13 = arith.constant 0 : index
      %22 = vector.load %arg5[%c0_12, %c0_13] : memref<16x1xf32, #tpu.memory_space<vmem>>, vector<16x1xf32>
      tpu.vector_store %arg5[%c0_12, %c0_13], %21 {strides = array<i32>} : memref<16x1xf32, #tpu.memory_space<vmem>>, vector<16x1xf32>,
    } else {
    }
    %c0_i32_7 = arith.constant 0 : i32
    %15 = arith.cmpi eq, %arg1, %c0_i32_7 : i32
    %16 = arith.extui %15 : i1 to i32
    %c0_i32_8 = arith.constant 0 : i32
    %17 = arith.cmpi ne, %16, %c0_i32_8 : i32
    scf.if %17 {
      %18 = vector.extract_strided_slice %3 {offsets = [0, 0], sizes = [8, 32], strides = [1, 1]} : vector<16x32xbf16> to vector<8x32xbf16>
      %19 = arith.extf %18 : vector<8x32xbf16> to vector<8x32xf32>
      %20 = vector.extract_strided_slice %3 {offsets = [8, 0], sizes = [8, 32], strides = [1, 1]} : vector<16x32xbf16> to vector<8x32xbf16>
      %21 = arith.extf %20 : vector<8x32xbf16> to vector<8x32xf32>
      %22 = arith.mulf %19, %21 : vector<8x32xf32>
      %cst_9 = arith.constant dense<0.000000e+00> : vector<8xf32>
      %23 = vector.multi_reduction <add>, %22, %cst_9 [1] : vector<8x32xf32> to vector<8xf32>
      %24 = vector.shape_cast %23 : vector<8xf32> to vector<8x1xf32>
      %c0_10 = arith.constant 0 : index
      %c0_11 = arith.constant 0 : index
      %25 = vector.load %arg5[%c0_10, %c0_11] : memref<16x1xf32, #tpu.memory_space<vmem>>, vector<16x1xf32>
      %26 = math.log %25 : vector<16x1xf32>
      %cst_12 = arith.constant 2.000000e+00 : f32
      %27 = vector.broadcast %cst_12 : f32 to vector<16x1xf32>
      %28 = arith.addf %27, %26 : vector<16x1xf32>
      %29 = tpu.concatenate %24, %24 in 0 : vector<8x1xf32>, vector<8x1xf32> -> vector<16x1xf32>
      %30 = arith.subf %28, %29 : vector<16x1xf32>
      %c0_13 = arith.constant 0 : index
      %c0_14 = arith.constant 0 : index
      %31 = vector.load %arg4[%c0_13, %c0_14] : memref<16x1xf32, #tpu.memory_space<vmem>>, vector<16x1xf32>
      tpu.vector_store %arg4[%c0_13, %c0_14], %30 {strides = array<i32>} : memref<16x1xf32, #tpu.memory_space<vmem>>, vector<16x1xf32>,
    } else {
    }
    return
  }
  func.func @transform_0(%arg0: i32, %arg1: i32) -> (i32, i32) {
    %c0_i32 = arith.constant 0 : i32
    %c0_i32_0 = arith.constant 0 : i32
    return %arg0, %c0_i32 : i32, i32
  }
  func.func @transform_1(%arg0: i32, %arg1: i32) -> (i32, i32) {
    %c0_i32 = arith.constant 0 : i32
    %c0_i32_0 = arith.constant 0 : i32
    return %arg1, %c0_i32 : i32, i32
  }
  func.func @transform_2(%arg0: i32, %arg1: i32) -> (i32, i32) {
    %c0_i32 = arith.constant 0 : i32
    %c0_i32_0 = arith.constant 0 : i32
    return %arg0, %c0_i32 : i32, i32
  }
}

</mosaic_0001>

<llo_original>
// kernel: tpu_custom_call.1
$region0: #{tpu_custom_call.1}
  #allocation0 [shape = 'u32[]', space=smem, size = 0x4, offset = 0x4, fixed_abs, tag = 'smem constant byte address 0x4 - core index']
  #allocation1 [shape = 'u32[144,128]{1,0:T(1,128)}', space=vmem, size = 0x12000, scoped, tag = 'internal scratch']
  #allocation2 [shape = 'f32[16,1]{1,0:T(8,128)}', space=vmem, size = 0x2000, scoped, tag = 'scratch operand']
  %s0 = inlined_call_operand.hbm [shape: bf16[16,32], index: 0, kind: input, shape index: {}]
  %s1 = inlined_call_operand.hbm [shape: bf16[16,32], index: 1, kind: input, shape index: {}]
  %s2 = inlined_call_operand.vmem [shape: f32[16,1], index: 2, kind: output, shape index: {}]
  %s3 = sld [smem:[#allocation0]]
  $region42: #{tpu_custom_call.1} parent=0
    _
  %s5 = ssub.s32 1, %s3
  %s6 = scalar_select 0, %s5, %s3
  $region1: #{tpu_custom_call.1} parent=0
    #allocation3 [shape = 'u8[4096]{0}', space=vmem, size = 0x1000, scoped, tag = 'input window, operand 0, single buffered']
    #allocation4 [shape = 's32[1]{0}', space=sflag, size = 0x4, scoped, tag = 'scoped memory for tpu_custom_call.1']
    #allocation5 [shape = 'u8[4096]{0}', space=vmem, size = 0x1000, scoped, tag = 'input window, operand 1, single buffered']
    #allocation6 [shape = 's32[1]{0}', space=sflag, size = 0x4, scoped, tag = 'scoped memory for tpu_custom_call.1']
    %7 = vsyncpa [#allocation4], 0
    %8 = vsyncpa [#allocation6], 0
    // Predicated region
    $region2: #{tpu_custom_call.1} parent=1 // pred_check
      _
    $region3: #{tpu_custom_call.1} parent=1 // pred_check_branch
      %10 = sbr.rel (0) target = $region5
    $region4: #{tpu_custom_call.1} parent=1 // pred_region
      %s12 = ssub.s32 128, 128
      %13 = vsyncadd [#allocation4], %s12
      %s14 = sshll.u32 [#allocation3], 4
      %s15 = int_to_ptr.vmem [resolvable:$true] %s14
      %20 = dma.hbm_to_vmem [thread:$0]  %s0, 128, %s15, [#allocation4], 64, 64, 4
    $region5: #{tpu_custom_call.1} parent=1 // pred_fallthru
      _
    // Predicated region
    $region6: #{tpu_custom_call.1} parent=1 // pred_check
      _
    $region7: #{tpu_custom_call.1} parent=1 // pred_check_branch
      %22 = sbr.rel (0) target = $region9
    $region8: #{tpu_custom_call.1} parent=1 // pred_region
      %s24 = ssub.s32 128, 128
      %25 = vsyncadd [#allocation6], %s24
      %s26 = sshll.u32 [#allocation5], 4
      %s27 = int_to_ptr.vmem [resolvable:$true] %s26
      %32 = dma.hbm_to_vmem [thread:$0]  %s1, 128, %s27, [#allocation6], 64, 64, 4
    $region9: #{tpu_custom_call.1} parent=1 // pred_fallthru
      _
    // Predicated region
    $region10: #{tpu_custom_call.1} parent=1 // pred_check
      _
    $region11: #{tpu_custom_call.1} parent=1 // pred_check_branch
      %34 = sbr.rel (0) target = $region13
    $region12: #{tpu_custom_call.1} parent=1 // pred_region
      %35 = dma.done [#allocation4], 128
    $region13: #{tpu_custom_call.1} parent=1 // pred_fallthru
      _
    // Predicated region
    $region14: #{tpu_custom_call.1} parent=1 // pred_check
      _
    $region15: #{tpu_custom_call.1} parent=1 // pred_check_branch
      %37 = sbr.rel (0) target = $region17
    $region16: #{tpu_custom_call.1} parent=1 // pred_region
      %38 = dma.done [#allocation6], 128
    $region17: #{tpu_custom_call.1} parent=1 // pred_fallthru
      _
    %p40 = scmp.eq.s32.totalorder 0, 0
    // Predicated region
    $region18: #{tpu_custom_call.1} parent=1 // pred_check
      %p41 = pneg %p40
    $region19: #{tpu_custom_call.1} parent=1 // pred_check_branch
      %43 = sbr.rel (%p41) target = $region21
    $region20: #{tpu_custom_call.1} parent=1 // pred_region
      %vm44 = vcmask 7168
      %45 = vst.msk [vmem:[#allocation2] sm:$0xff] %vm44, 0.0
      %46 = vst.msk [vmem:[#allocation2 + $0x8] sm:$0xff] %vm44, 0.0
    $region21: #{tpu_custom_call.1} parent=1 // pred_fallthru
      _
    %v47 = vld [vmem:[#allocation3] sm:$0xf]
    %v48 = vld [vmem:[#allocation3 + $0x4] sm:$0xf]
    %v49 = vld [vmem:[#allocation5] sm:$0xf]
    %v50 = vld [vmem:[#allocation5 + $0x4] sm:$0xf]
    %v53 = vunpack.c.l.b16 %v47
    %v54 = vunpack.c.l.b16 %v48
    %v55 = vpack.c.b16 %v54, %v53
    %v58 = vunpack.c.l.b16 %v49
    %v59 = vunpack.c.l.b16 %v50
    %v60 = vpack.c.b16 %v59, %v58
    %vm61 = vcmask 261120
    %v63 = vsel %vm61, %v55, 0
    %v66 = vsel %vm61, %v60, 0
    %68 = vmatprep.subr.bf16.mxu0 0
    %69 = vmatpush1.bf16.xpose.msra.mxu0 %v66
    %70 = vmatprep.subr.bf16.mxu0 0
    %71 = vmatpush1.bf16.xpose.msra.mxu0 0
    %72 = vmatprep.subr.bf16.mxu0 0
    %73 = vmatpush1.bf16.xpose.msra.mxu0 0
    %74 = vmatprep.subr.bf16.mxu0 0
    %75 = vmatpush1.bf16.xpose.msra.mxu0 0
    %76 = vmatprep.subr.bf16.mxu0 0
    %77 = vmatpush1.bf16.xpose.msra.mxu0 0
    %78 = vmatprep.subr.bf16.mxu0 0
    %79 = vmatpush1.bf16.xpose.msra.mxu0 0
    %80 = vmatprep.subr.bf16.mxu0 0
    %81 = vmatpush1.bf16.xpose.msra.mxu0 0
    %82 = vmatprep.subr.bf16.mxu0 0
    %83 = vmatpush1.bf16.xpose.msra.mxu0 0
    %84 = vmatprep.subr.bf16.mxu0 0
    %85 = vmatpush1.bf16.xpose.msra.mxu0 0
    %86 = vmatprep.subr.bf16.mxu0 0
    %87 = vmatpush1.bf16.xpose.msra.mxu0 0
    %88 = vmatprep.subr.bf16.mxu0 0
    %89 = vmatpush1.bf16.xpose.msra.mxu0 0
    %90 = vmatprep.subr.bf16.mxu0 0
    %91 = vmatpush1.bf16.xpose.msra.mxu0 0
    %92 = vmatprep.subr.bf16.mxu0 0
    %93 = vmatpush1.bf16.xpose.msra.mxu0 0
    %94 = vmatprep.subr.bf16.mxu0 0
    %95 = vmatpush1.bf16.xpose.msra.mxu0 0
    %96 = vmatprep.subr.bf16.mxu0 0
    %97 = vmatpush1.bf16.xpose.msra.mxu0 0
    %98 = vmatprep.subr.bf16.mxu0 0
    %99 = vmatpush1.bf16.xpose.msra.mxu0 0
    %100 = vmatprep.mubr.bf16.mxu0 0
    %101 = vmatmul.mubr.bf16.gmra.mrb[0].mxu0 %v63
    %v102 = vpop.f32.mrb[0].mxu0
    %v103 = vadd.f32 0.0, %v102
    %v104 = vpop.f32.mrb[0].mxu0
    %v105 = vpop.f32.mrb[0].mxu0
    %v106 = vadd.f32 0.0, %v105
    %v107 = vpop.f32.mrb[0].mxu0
    %108 = vdwg.mxu0
    %v109 = vsub.f32 %v103, 2.0
    %v110 = vsub.f32 %v106, 2.0
    %v111 = vmul.f32 %v109, 1.442695
    %v112 = vpow.pop %v111
    %v113 = vmul.f32 %v110, 1.442695
    %v114 = vpow.pop %v113
    %p115 = scmp.eq.s32.totalorder 0, 0
    // Predicated region
    $region22: #{tpu_custom_call.1} parent=1 // pred_check
      %p116 = pneg %p115
    $region23: #{tpu_custom_call.1} parent=1 // pred_check_branch
      %118 = sbr.rel (%p116) target = $region25
    $region24: #{tpu_custom_call.1} parent=1 // pred_region
      %v119 = vlaneseq
      %v120 = vshrl.u32 %v119, 7
      %v121 = vadd.s32 %v120, 8
      %v122 = vlaneseq
      %v123 = vand.u32 %v122, 127
      %v124 = vld [vmem:[#allocation2] sm:$0xff]
      %v125 = vld [vmem:[#allocation2 + $0x8] sm:$0xff]
      %vm126 = vcmp.ne.s32.totalorder %v120, %v123
      %vm127 = vcmp.ne.s32.totalorder %v121, %v123
      %v128 = vsel %vm126, %v112, 0.0
      %v129 = vsel %vm127, %v114, 0.0
      %vm130 = vcmask 130048
      %v131 = vsel %vm130, %v128, 0.0
      %132 = vadd.xlane.f32.xlu0 %v131
      %v133 = vpop.xlane.xlu0 %132
      %v134 = vsel %vm130, %v129, 0.0
      %135 = vadd.xlane.f32.xlu0 %v134
      %v136 = vpop.xlane.xlu0 %135
      %v137 = vadd.f32 %v124, %v133
      %v138 = vadd.f32 %v125, %v136
      %vm139 = vcmask 7168
      %140 = vst.msk [vmem:[#allocation2] sm:$0xff] %vm139, %v137
      %141 = vst.msk [vmem:[#allocation2 + $0x8] sm:$0xff] %vm139, %v138
    $region25: #{tpu_custom_call.1} parent=1 // pred_fallthru
      _
    %p142 = scmp.ne.s32.totalorder 0, 0
    // Predicated region
    $region26: #{tpu_custom_call.1} parent=1 // pred_check
      %p143 = pneg %p142
    $region27: #{tpu_custom_call.1} parent=1 // pred_check_branch
      %145 = sbr.rel (%p143) target = $region29
    $region28: #{tpu_custom_call.1} parent=1 // pred_region
      %v146 = vld [vmem:[#allocation2] sm:$0xff]
      %v147 = vld [vmem:[#allocation2 + $0x8] sm:$0xff]
      %vm148 = vcmask 130048
      %v149 = vsel %vm148, %v112, 0.0
      %150 = vadd.xlane.f32.xlu0 %v149
      %v151 = vpop.xlane.xlu0 %150
      %v152 = vsel %vm148, %v114, 0.0
      %153 = vadd.xlane.f32.xlu0 %v152
      %v154 = vpop.xlane.xlu0 %153
      %v155 = vadd.f32 %v146, %v151
      %v156 = vadd.f32 %v147, %v154
      %vm157 = vcmask 7168
      %158 = vst.msk [vmem:[#allocation2] sm:$0xff] %vm157, %v155
      %159 = vst.msk [vmem:[#allocation2 + $0x8] sm:$0xff] %vm157, %v156
    $region29: #{tpu_custom_call.1} parent=1 // pred_fallthru
      _
    // Predicated region
    $region30: #{tpu_custom_call.1} parent=1 // pred_check
      %p160 = pneg %p40
    $region31: #{tpu_custom_call.1} parent=1 // pred_check_branch
      %162 = sbr.rel (%p160) target = $region33
    $region32: #{tpu_custom_call.1} parent=1 // pred_region
      %v163 = vunpack.c.l.bf16 %v47
      %v164 = vunpack.c.l.bf16 %v48
      %v165 = vmul.f32 %v163, %v164
      %v166 = vsel %vm61, %v165, 0.0
      %167 = vadd.xlane.f32.xlu0 %v166
      %v168 = vpop.xlane.xlu0 %167
      %v169 = vld [vmem:[#allocation2] sm:$0xff]
      %v170 = vld [vmem:[#allocation2 + $0x8] sm:$0xff]
      %v171 = vlog2.pop %v169
      %v172 = vmul.f32 %v171, 0.6931472
      %v173 = vlog2.pop %v170
      %v174 = vmul.f32 %v173, 0.6931472
      %v175 = vadd.f32 %v172, 2.0
      %v176 = vadd.f32 %v174, 2.0
      %v177 = vsub.f32 %v175, %v168
      %v178 = vsub.f32 %v176, %v168
      %vm179 = vcmask 7168
      %180 = vst.msk [vmem:[%s2] sm:$0xff] %vm179, %v177
      %181 = vst.msk [vmem:[%s2 + $0x8] sm:$0xff] %vm179, %v178
    $region33: #{tpu_custom_call.1} parent=1 // pred_fallthru
      _
    // Predicated region
    $region34: #{tpu_custom_call.1} parent=1 // pred_check
      _
    $region35: #{tpu_custom_call.1} parent=1 // pred_check_branch
      %183 = sbr.rel (0) target = $region37
    $region36: #{tpu_custom_call.1} parent=1 // pred_region
      _
    $region37: #{tpu_custom_call.1} parent=1 // pred_fallthru
      _
    // Predicated region
    $region38: #{tpu_custom_call.1} parent=1 // pred_check
      _
    $region39: #{tpu_custom_call.1} parent=1 // pred_check_branch
      %185 = sbr.rel (0) target = $region41
    $region40: #{tpu_custom_call.1} parent=1 // pred_region
      _
    $region41: #{tpu_custom_call.1} parent=1 // pred_fallthru
      _
    %186 = vsyncpa [#allocation4], 1
    %187 = vsyncpa [#allocation6], 1

</llo_original>
